<compile_context>
chip_gen: v6e
topology: v6e:2x2x1
jax: 0.10.0
libtpu: 0.0.40
codegen_flags: <defaults>
</compile_context>

<pallas_src>
import functools

import jax
import jax.numpy as jnp
import numpy as np
from jax import lax
from jax.experimental import pallas as pl
from jax.experimental.pallas import tpu as pltpu

_LANES = 128
_SUB = 8              # sublanes per vreg / accumulator rows
_BR_CAP = 1024        # max rows per row block (bounds static chunk-loop length)
_CHUNK = 32           # compute-chunk rows (keeps live set well under 64 vregs)


def _round_up(x, mult):
    return -(-x // mult) * mult


def _hw_budget():
    """(max rows per grid step, vmem_limit cap) chosen per TPU generation."""
    try:
        vmem_bytes = int(getattr(pltpu.get_tpu_info(), "vmem_capacity_bytes",
                                 64 << 20))
    except Exception:
        vmem_bytes = 64 << 20
    if vmem_bytes >= (100 << 20):      # v5e / v6e: 128 MiB VMEM -> bigger tiles
        return 8192, 96 << 20
    return 4096, 40 << 20              # v7x (64 MiB VMEM) or unknown


def _prep(x, t_dim):
    """(t, ...) -> (t, f_rows, 128) with minimal (usually zero) padding.

    Only pads when the per-frame element count is not a multiple of 128 lanes
    (rare) or smaller than one (8,128) vreg tile; the common 128-aligned case
    is a free reshape, so no extra HBM read+write before the kernel.  Zero
    padding contributes 0 to every partial sum; true element counts are used
    as denominators.
    """
    per_frame = int(np.prod(x.shape[1:]))
    x2 = x.reshape(t_dim, per_frame)
    if per_frame < _SUB * _LANES:
        padded = _SUB * _LANES
    else:
        padded = _round_up(per_frame, _LANES)
    if padded != per_frame:
        # TODO(synk): a fully pad-free path for non-128-aligned frames would
        # need a flat 1-D layout + in-kernel lane masking; not worth it here.
        x2 = jnp.pad(x2, ((0, 0), (0, padded - per_frame)))
    return x2.reshape(t_dim, padded // _LANES, _LANES)


def _loss_kernel(pred_ref, gt_ref, diff_ref, gtd_ref,
                 o_sq_ref, o_abs_ref, o_dsq_ref, carry_ref,
                 *, t, m, br_f, ch, f_rows, n_groups):
    """One grid step: (up to) m frames x br_f rows x 128 lanes of every stream.

    Accumulates sum((pred-gt)^2), sum(|pred-gt|) and
    sum((diff - (gt_diff[f+1]-gt_diff[f]))^2) into resident (1,8,128) output
    blocks; the cross-group finite-difference term uses the combined carry
    slab (diff + gt_diff of the previous group's last frame) in VMEM scratch.
    """
    j = pl.program_id(0)          # row block index        ("parallel" axis)
    i = pl.program_id(1)          # frame group index      (sequential carry axis)
    n_sub = br_f // ch
    ragged_rows = (f_rows % br_f) != 0

    def sl(c):
        return pl.ds(c * ch, ch)

    def row_mask(c):
        if not ragged_rows:
            return None
        rv = f_rows - j * br_f                           # valid rows in block j
        rid = lax.broadcasted_iota(jnp.int32, (ch, _LANES), 0) + c * ch
        return rid < rv

    def apply_mask(mask, x):
        return x if mask is None else jnp.where(mask, x, 0.0)

    def fold(x):                  # (ch,128) -> (8,128): pure VPU vreg adds
        return jnp.sum(x.reshape(ch // _SUB, _SUB, _LANES), axis=0)

    # ---- init: first frame group of this row block --------------------------
    @pl.when(i == 0)
    def _init():
        o_sq_ref[...] = jnp.zeros_like(o_sq_ref)
        o_abs_ref[...] = jnp.zeros_like(o_abs_ref)
        o_dsq_ref[...] = jnp.zeros_like(o_dsq_ref)
        # Seed the carry with gt_diff[frame 0] so the boundary term below is an
        # exact 0 at i == 0 (no select, no separate pass).
        for c in range(n_sub):
            carry_ref[sl(c)] = gtd_ref[0, sl(c)].astype(jnp.float32)

    # ---- frame 0 (peeled; fuses the cross-group finite-difference term) -----
    acc_sq = jnp.zeros((_SUB, _LANES), jnp.float32)
    acc_abs = jnp.zeros((_SUB, _LANES), jnp.float32)
    acc_dsq = jnp.zeros((_SUB, _LANES), jnp.float32)
    for c in range(n_sub):
        msk = row_mask(c)
        p = pred_ref[0, sl(c)].astype(jnp.float32)
        g = gt_ref[0, sl(c)].astype(jnp.float32)
        cur = gtd_ref[0, sl(c)].astype(jnp.float32)
        d = apply_mask(msk, p - g)
        acc_sq = acc_sq + fold(d * d)
        acc_abs = acc_abs + fold(jnp.abs(d))
        # carry = diff[prev last] + gt_diff[prev last]  (== gt_diff[0] at i==0)
        e = apply_mask(msk, carry_ref[sl(c)] - cur)
        acc_dsq = acc_dsq + fold(e * e)
    o_sq_ref[0] += acc_sq
    o_abs_ref[0] += acc_abs
    o_dsq_ref[0] += acc_dsq

    # ---- frames 1 .. valid-1 -------------------------------------------------
    if m > 1:
        valid = m if t % m == 0 else jnp.minimum(m, t - i * m)

        @pl.loop(1, valid)
        def _frames(f):
            a_sq = jnp.zeros((_SUB, _LANES), jnp.float32)
            a_abs = jnp.zeros((_SUB, _LANES), jnp.float32)
            a_dsq = jnp.zeros((_SUB, _LANES), jnp.float32)
            for c in range(n_sub):
                msk = row_mask(c)
                p = pred_ref[f, sl(c)].astype(jnp.float32)
                g = gt_ref[f, sl(c)].astype(jnp.float32)
                cur = gtd_ref[f, sl(c)].astype(jnp.float32)
                gprev = gtd_ref[f - 1, sl(c)].astype(jnp.float32)
                dprev = diff_ref[f - 1, sl(c)].astype(jnp.float32)
                d = apply_mask(msk, p - g)
                a_sq = a_sq + fold(d * d)
                a_abs = a_abs + fold(jnp.abs(d))
                e = apply_mask(msk, dprev + gprev - cur)
                a_dsq = a_dsq + fold(e * e)
            o_sq_ref[0] += a_sq
            o_abs_ref[0] += a_abs
            o_dsq_ref[0] += a_dsq

    # ---- single combined carry slab for the next frame group ----------------
    if n_groups > 1:
        @pl.when(i < n_groups - 1)        # a next group exists -> this one is full
        def _store_carry():
            for c in range(n_sub):
                carry_ref[sl(c)] = (diff_ref[m - 1, sl(c)].astype(jnp.float32)
                                    + gtd_ref[m - 1, sl(c)].astype(jnp.float32))


@functools.partial(jax.jit, static_argnames=("rows_per_step",))
def my_mse_mae_ssim_diff(pred, gt, diff, gt_diff, rows_per_step=None):
    """Forward of MyMseMaeSSIMDiff. Returns a float32 scalar."""
    t = pred.shape[0]
    assert t >= 2, "need at least 2 frames for the finite-difference term"
    assert diff.shape[0] == t - 1
    assert gt.shape == pred.shape and gt_diff.shape == pred.shape

    p3 = _prep(pred, t)
    g3 = _prep(gt, t)
    gd3 = _prep(gt_diff, t)
    d3 = _prep(diff, t - 1)
    f_rows = p3.shape[1]

    rows_cap, vmem_cap = _hw_budget()
    if rows_per_step is not None:
        rows_cap = int(rows_per_step)

    # Row blocks: a multiple of 8 (32 when possible, so the compute chunk is
    # 32 rows), >= 2 blocks whenever there are >= 16 rows so the "parallel"
    # axis can split across v7x's two TensorCores.  Ragged last block is
    # masked in-kernel, so no row padding is ever required.
    if f_rows >= 2 * _CHUNK:
        br_f = min(_BR_CAP, _round_up(pl.cdiv(f_rows, 2), _CHUNK))
    elif f_rows >= 2 * _SUB:
        br_f = _round_up(pl.cdiv(f_rows, 2), _SUB)
    else:
        br_f = _SUB
    nj = pl.cdiv(f_rows, br_f)

    # Frame groups: grow m (not br_f) up to the per-step rows budget; the
    # ragged last group is handled by the dynamic frame count in-kernel.
    m = max(1, min(t, rows_cap // br_f))
    n_groups = pl.cdiv(t, m)
    n_db = pl.cdiv(t - 1, m)                     # diff frame-block count (clamp)
    diff_frames = m if n_groups > 1 else t - 1   # keep diff block inside (t-1)

    ch = _CHUNK
    while br_f % ch:
        ch //= 2                                 # br_f is a multiple of 8

    blk = (m, br_f, _LANES)
    in_specs = [
        pl.BlockSpec(blk, lambda j, i: (i, j, 0)),                       # pred
        pl.BlockSpec(blk, lambda j, i: (i, j, 0)),                       # gt
        pl.BlockSpec((diff_frames, br_f, _LANES),
                     lambda j, i: (jnp.minimum(i, n_db - 1), j, 0)),     # diff
        pl.BlockSpec(blk, lambda j, i: (i, j, 0)),                       # gt_diff
    ]
    out_spec = pl.BlockSpec((1, _SUB, _LANES), lambda j, i: (j, 0, 0))
    out_sds = jax.ShapeDtypeStruct((nj, _SUB, _LANES), jnp.float32)

    itemsize = max(jnp.dtype(pred.dtype).itemsize,
                   jnp.dtype(gt_diff.dtype).itemsize)
    est = (8 * m * br_f * _LANES * itemsize      # 4 double-buffered input streams
           + br_f * _LANES * 4                   # combined carry slab
           + (4 << 20))                          # outputs / headroom
    vmem_limit = int(min(max(est, 16 << 20), vmem_cap))

    kernel = functools.partial(_loss_kernel, t=t, m=m, br_f=br_f, ch=ch,
                               f_rows=f_rows, n_groups=n_groups)
    o_sq, o_abs, o_dsq = pl.pallas_call(
        kernel,
        out_shape=(out_sds, out_sds, out_sds),
        grid_spec=pltpu.PrefetchScalarGridSpec(
            num_scalar_prefetch=0,
            grid=(nj, n_groups),
            in_specs=in_specs,
            out_specs=(out_spec, out_spec, out_spec),
            scratch_shapes=[pltpu.VMEM((br_f, _LANES), jnp.float32)],
        ),
        compiler_params=pltpu.CompilerParams(
            dimension_semantics=("parallel", "arbitrary"),
            vmem_limit_bytes=vmem_limit,
        ),
    )(p3, g3, d3, gd3)

    n_pg = jnp.float32(pred.size)
    n_df = jnp.float32(diff.size)
    return (jnp.sum(o_sq) + jnp.sum(o_abs)) / n_pg + jnp.sum(o_dsq) / n_df


def _reference(pred, gt, diff, gt_diff):
    data_diff = gt_diff[1:] - gt_diff[:-1]
    mse_diff = jnp.square(diff - data_diff)
    mse = jnp.square(pred - gt)
    mae = jnp.abs(pred - gt)
    return jnp.mean(mse) + jnp.mean(mae) + jnp.mean(mse_diff)


def _run_case(key, shape, **kw):
    t = shape[0]
    k1, k2, k3, k4 = jax.random.split(key, 4)
    pred = jax.random.normal(k1, shape, dtype=jnp.float32)
    gt = jax.random.normal(k2, shape, dtype=jnp.float32)
    gt_diff = jax.random.normal(k3, shape, dtype=jnp.float32)
    diff = jax.random.normal(k4, (t - 1,) + shape[1:], dtype=jnp.float32)
    out = jax.block_until_ready(my_mse_mae_ssim_diff(pred, gt, diff, gt_diff, **kw))
    ref = _reference(pred, gt, diff, gt_diff)
    np.testing.assert_allclose(np.asarray(out), np.asarray(ref),
                               rtol=1e-5, atol=1e-5)


if __name__ == "__main__":
    key = jax.random.PRNGKey(0)
    k0, k1 = jax.random.split(key)
    # Video-style (T,B,C,H,W): lane-aligned frames, row axis split in 2 blocks.
    _run_case(k0, (8, 2, 4, 16, 16))
    # Ragged coverage: prime T, non-8-divisible row count and multiple (ragged)
    # frame groups forced via a small per-step rows budget -> exercises the
    # row mask, the carry slab, the boundary term and the dynamic frame count.
    _run_case(k1, (7, 2, 4, 10, 16), rows_per_step=16)
    print("KERNEL_OK")
</pallas_src>

<mosaic_0001>
module attributes {stable_mosaic.version = 11 : i64} {
  func.func @_loss_kernel(%arg0: i32, %arg1: i32, %arg2: memref<8x8x128xf32, #tpu.memory_space<vmem>>, %arg3: memref<8x8x128xf32, #tpu.memory_space<vmem>>, %arg4: memref<7x8x128xf32, #tpu.memory_space<vmem>>, %arg5: memref<8x8x128xf32, #tpu.memory_space<vmem>>, %arg6: memref<1x8x128xf32, #tpu.memory_space<vmem>>, %arg7: memref<1x8x128xf32, #tpu.memory_space<vmem>>, %arg8: memref<1x8x128xf32, #tpu.memory_space<vmem>>, %arg9: memref<8x128xf32, #tpu.memory_space<vmem>>) attributes {dimension_semantics = [#tpu.dimension_semantics<parallel>, #tpu.dimension_semantics<arbitrary>], iteration_bounds = array<i64: 2, 1>, scalar_prefetch = 0 : i64, scratch_operands = 1 : i64, tpu.core_type = #tpu.core_type<tc>, window_params = [{transform_indices = @transform_0, window_bounds = array<i64: 8, 8, 128>}, {transform_indices = @transform_1, window_bounds = array<i64: 8, 8, 128>}, {transform_indices = @transform_2, window_bounds = array<i64: 7, 8, 128>}, {transform_indices = @transform_3, window_bounds = array<i64: 8, 8, 128>}, {transform_indices = @transform_4, window_bounds = array<i64: 1, 8, 128>}, {transform_indices = @transform_5, window_bounds = array<i64: 1, 8, 128>}, {transform_indices = @transform_6, window_bounds = array<i64: 1, 8, 128>}]} {
    %c0_i32 = arith.constant 0 : i32
    %0 = arith.cmpi eq, %arg1, %c0_i32 : i32
    %1 = arith.extui %0 : i1 to i32
    %c0_i32_0 = arith.constant 0 : i32
    %2 = arith.cmpi ne, %1, %c0_i32_0 : i32
    scf.if %2 {
      %cst_36 = arith.constant 0.000000e+00 : f32
      %46 = vector.broadcast %cst_36 : f32 to vector<1x8x128xf32>
      %c0_37 = arith.constant 0 : index
      %c0_38 = arith.constant 0 : index
      %c0_39 = arith.constant 0 : index
      %47 = vector.load %arg6[%c0_37, %c0_38, %c0_39] : memref<1x8x128xf32, #tpu.memory_space<vmem>>, vector<1x8x128xf32>
      tpu.vector_store %arg6[%c0_37, %c0_38, %c0_39], %46 {strides = array<i32>} : memref<1x8x128xf32, #tpu.memory_space<vmem>>, vector<1x8x128xf32>,
      %cst_40 = arith.constant 0.000000e+00 : f32
      %48 = vector.broadcast %cst_40 : f32 to vector<1x8x128xf32>
      %c0_41 = arith.constant 0 : index
      %c0_42 = arith.constant 0 : index
      %c0_43 = arith.constant 0 : index
      %49 = vector.load %arg7[%c0_41, %c0_42, %c0_43] : memref<1x8x128xf32, #tpu.memory_space<vmem>>, vector<1x8x128xf32>
      tpu.vector_store %arg7[%c0_41, %c0_42, %c0_43], %48 {strides = array<i32>} : memref<1x8x128xf32, #tpu.memory_space<vmem>>, vector<1x8x128xf32>,
      %cst_44 = arith.constant 0.000000e+00 : f32
      %50 = vector.broadcast %cst_44 : f32 to vector<1x8x128xf32>
      %c0_45 = arith.constant 0 : index
      %c0_46 = arith.constant 0 : index
      %c0_47 = arith.constant 0 : index
      %51 = vector.load %arg8[%c0_45, %c0_46, %c0_47] : memref<1x8x128xf32, #tpu.memory_space<vmem>>, vector<1x8x128xf32>
      tpu.vector_store %arg8[%c0_45, %c0_46, %c0_47], %50 {strides = array<i32>} : memref<1x8x128xf32, #tpu.memory_space<vmem>>, vector<1x8x128xf32>,
      %c0_48 = arith.constant 0 : index
      %c0_49 = arith.constant 0 : index
      %c0_50 = arith.constant 0 : index
      %52 = vector.load %arg5[%c0_48, %c0_49, %c0_50] : memref<8x8x128xf32, #tpu.memory_space<vmem>>, vector<1x8x128xf32>
      %53 = vector.shape_cast %52 : vector<1x8x128xf32> to vector<8x128xf32>
      %c0_51 = arith.constant 0 : index
      %c0_52 = arith.constant 0 : index
      %54 = vector.load %arg9[%c0_51, %c0_52] : memref<8x128xf32, #tpu.memory_space<vmem>>, vector<8x128xf32>
      tpu.vector_store %arg9[%c0_51, %c0_52], %53 {strides = array<i32>} : memref<8x128xf32, #tpu.memory_space<vmem>>, vector<8x128xf32>,
    } else {
    }
    %cst = arith.constant 0.000000e+00 : f32
    %3 = vector.broadcast %cst : f32 to vector<8x128xf32>
    %cst_1 = arith.constant 0.000000e+00 : f32
    %4 = vector.broadcast %cst_1 : f32 to vector<8x128xf32>
    %cst_2 = arith.constant 0.000000e+00 : f32
    %5 = vector.broadcast %cst_2 : f32 to vector<8x128xf32>
    %c0 = arith.constant 0 : index
    %c0_3 = arith.constant 0 : index
    %c0_4 = arith.constant 0 : index
    %6 = vector.load %arg2[%c0, %c0_3, %c0_4] : memref<8x8x128xf32, #tpu.memory_space<vmem>>, vector<1x8x128xf32>
    %7 = vector.shape_cast %6 : vector<1x8x128xf32> to vector<8x128xf32>
    %c0_5 = arith.constant 0 : index
    %c0_6 = arith.constant 0 : index
    %c0_7 = arith.constant 0 : index
    %8 = vector.load %arg3[%c0_5, %c0_6, %c0_7] : memref<8x8x128xf32, #tpu.memory_space<vmem>>, vector<1x8x128xf32>
    %9 = vector.shape_cast %8 : vector<1x8x128xf32> to vector<8x128xf32>
    %c0_8 = arith.constant 0 : index
    %c0_9 = arith.constant 0 : index
    %c0_10 = arith.constant 0 : index
    %10 = vector.load %arg5[%c0_8, %c0_9, %c0_10] : memref<8x8x128xf32, #tpu.memory_space<vmem>>, vector<1x8x128xf32>
    %11 = vector.shape_cast %10 : vector<1x8x128xf32> to vector<8x128xf32>
    %12 = arith.subf %7, %9 : vector<8x128xf32>
    %13 = arith.mulf %12, %12 : vector<8x128xf32>
    %14 = vector.shape_cast %13 : vector<8x128xf32> to vector<1x8x128xf32>
    %cst_11 = arith.constant dense<0.000000e+00> : vector<8x128xf32>
    %15 = vector.multi_reduction <add>, %14, %cst_11 [0] : vector<1x8x128xf32> to vector<8x128xf32>
    %16 = arith.addf %3, %15 : vector<8x128xf32>
    %17 = math.absf %12 : vector<8x128xf32>
    %18 = vector.shape_cast %17 : vector<8x128xf32> to vector<1x8x128xf32>
    %cst_12 = arith.constant dense<0.000000e+00> : vector<8x128xf32>
    %19 = vector.multi_reduction <add>, %18, %cst_12 [0] : vector<1x8x128xf32> to vector<8x128xf32>
    %20 = arith.addf %4, %19 : vector<8x128xf32>
    %c0_13 = arith.constant 0 : index
    %c0_14 = arith.constant 0 : index
    %21 = vector.load %arg9[%c0_13, %c0_14] : memref<8x128xf32, #tpu.memory_space<vmem>>, vector<8x128xf32>
    %22 = arith.subf %21, %11 : vector<8x128xf32>
    %23 = arith.mulf %22, %22 : vector<8x128xf32>
    %24 = vector.shape_cast %23 : vector<8x128xf32> to vector<1x8x128xf32>
    %cst_15 = arith.constant dense<0.000000e+00> : vector<8x128xf32>
    %25 = vector.multi_reduction <add>, %24, %cst_15 [0] : vector<1x8x128xf32> to vector<8x128xf32>
    %26 = arith.addf %5, %25 : vector<8x128xf32>
    %c0_16 = arith.constant 0 : index
    %c0_17 = arith.constant 0 : index
    %c0_18 = arith.constant 0 : index
    %27 = vector.load %arg6[%c0_16, %c0_17, %c0_18] : memref<1x8x128xf32, #tpu.memory_space<vmem>>, vector<1x8x128xf32>
    %28 = vector.shape_cast %27 : vector<1x8x128xf32> to vector<8x128xf32>
    %29 = arith.addf %28, %16 : vector<8x128xf32>
    %c0_19 = arith.constant 0 : index
    %c0_20 = arith.constant 0 : index
    %c0_21 = arith.constant 0 : index
    %30 = vector.load %arg6[%c0_19, %c0_20, %c0_21] : memref<1x8x128xf32, #tpu.memory_space<vmem>>, vector<1x8x128xf32>
    %31 = vector.shape_cast %30 : vector<1x8x128xf32> to vector<8x128xf32>
    %32 = vector.shape_cast %29 : vector<8x128xf32> to vector<1x8x128xf32>
    tpu.vector_store %arg6[%c0_19, %c0_20, %c0_21], %32 {strides = array<i32>} : memref<1x8x128xf32, #tpu.memory_space<vmem>>, vector<1x8x128xf32>,
    %c0_22 = arith.constant 0 : index
    %c0_23 = arith.constant 0 : index
    %c0_24 = arith.constant 0 : index
    %33 = vector.load %arg7[%c0_22, %c0_23, %c0_24] : memref<1x8x128xf32, #tpu.memory_space<vmem>>, vector<1x8x128xf32>
    %34 = vector.shape_cast %33 : vector<1x8x128xf32> to vector<8x128xf32>
    %35 = arith.addf %34, %20 : vector<8x128xf32>
    %c0_25 = arith.constant 0 : index
    %c0_26 = arith.constant 0 : index
    %c0_27 = arith.constant 0 : index
    %36 = vector.load %arg7[%c0_25, %c0_26, %c0_27] : memref<1x8x128xf32, #tpu.memory_space<vmem>>, vector<1x8x128xf32>
    %37 = vector.shape_cast %36 : vector<1x8x128xf32> to vector<8x128xf32>
    %38 = vector.shape_cast %35 : vector<8x128xf32> to vector<1x8x128xf32>
    tpu.vector_store %arg7[%c0_25, %c0_26, %c0_27], %38 {strides = array<i32>} : memref<1x8x128xf32, #tpu.memory_space<vmem>>, vector<1x8x128xf32>,
    %c0_28 = arith.constant 0 : index
    %c0_29 = arith.constant 0 : index
    %c0_30 = arith.constant 0 : index
    %39 = vector.load %arg8[%c0_28, %c0_29, %c0_30] : memref<1x8x128xf32, #tpu.memory_space<vmem>>, vector<1x8x128xf32>
    %40 = vector.shape_cast %39 : vector<1x8x128xf32> to vector<8x128xf32>
    %41 = arith.addf %40, %26 : vector<8x128xf32>
    %c0_31 = arith.constant 0 : index
    %c0_32 = arith.constant 0 : index
    %c0_33 = arith.constant 0 : index
    %42 = vector.load %arg8[%c0_31, %c0_32, %c0_33] : memref<1x8x128xf32, #tpu.memory_space<vmem>>, vector<1x8x128xf32>
    %43 = vector.shape_cast %42 : vector<1x8x128xf32> to vector<8x128xf32>
    %44 = vector.shape_cast %41 : vector<8x128xf32> to vector<1x8x128xf32>
    tpu.vector_store %arg8[%c0_31, %c0_32, %c0_33], %44 {strides = array<i32>} : memref<1x8x128xf32, #tpu.memory_space<vmem>>, vector<1x8x128xf32>,
    %c0_i32_34 = arith.constant 0 : i32
    %c7_i32 = arith.constant 7 : i32
    %45 = arith.addi %c0_i32_34, %c7_i32 : i32
    %c1_i32 = arith.constant 1 : i32
    scf.for %arg10 = %c0_i32_34 to %45 step %c1_i32  : i32 {
      %c1_i32_36 = arith.constant 1 : i32
      %46 = arith.muli %arg10, %c1_i32_36 : i32
      %c1_i32_37 = arith.constant 1 : i32
      %47 = arith.addi %c1_i32_37, %46 : i32
      %cst_38 = arith.constant 0.000000e+00 : f32
      %48 = vector.broadcast %cst_38 : f32 to vector<8x128xf32>
      %cst_39 = arith.constant 0.000000e+00 : f32
      %49 = vector.broadcast %cst_39 : f32 to vector<8x128xf32>
      %cst_40 = arith.constant 0.000000e+00 : f32
      %50 = vector.broadcast %cst_40 : f32 to vector<8x128xf32>
      %51 = arith.index_cast %47 : i32 to index
      %c0_41 = arith.constant 0 : index
      %c0_42 = arith.constant 0 : index
      %52 = vector.load %arg2[%51, %c0_41, %c0_42] : memref<8x8x128xf32, #tpu.memory_space<vmem>>, vector<1x8x128xf32>
      %53 = vector.shape_cast %52 : vector<1x8x128xf32> to vector<8x128xf32>
      %54 = arith.index_cast %47 : i32 to index
      %c0_43 = arith.constant 0 : index
      %c0_44 = arith.constant 0 : index
      %55 = vector.load %arg3[%54, %c0_43, %c0_44] : memref<8x8x128xf32, #tpu.memory_space<vmem>>, vector<1x8x128xf32>
      %56 = vector.shape_cast %55 : vector<1x8x128xf32> to vector<8x128xf32>
      %57 = arith.index_cast %47 : i32 to index
      %c0_45 = arith.constant 0 : index
      %c0_46 = arith.constant 0 : index
      %58 = vector.load %arg5[%57, %c0_45, %c0_46] : memref<8x8x128xf32, #tpu.memory_space<vmem>>, vector<1x8x128xf32>
      %59 = vector.shape_cast %58 : vector<1x8x128xf32> to vector<8x128xf32>
      %c1_i32_47 = arith.constant 1 : i32
      %60 = arith.subi %47, %c1_i32_47 : i32
      %61 = arith.index_cast %60 : i32 to index
      %c0_48 = arith.constant 0 : index
      %c0_49 = arith.constant 0 : index
      %62 = vector.load %arg5[%61, %c0_48, %c0_49] : memref<8x8x128xf32, #tpu.memory_space<vmem>>, vector<1x8x128xf32>
      %63 = vector.shape_cast %62 : vector<1x8x128xf32> to vector<8x128xf32>
      %c1_i32_50 = arith.constant 1 : i32
      %64 = arith.subi %47, %c1_i32_50 : i32
      %65 = arith.index_cast %64 : i32 to index
      %c0_51 = arith.constant 0 : index
      %c0_52 = arith.constant 0 : index
      %66 = vector.load %arg4[%65, %c0_51, %c0_52] : memref<7x8x128xf32, #tpu.memory_space<vmem>>, vector<1x8x128xf32>
      %67 = vector.shape_cast %66 : vector<1x8x128xf32> to vector<8x128xf32>
      %68 = arith.subf %53, %56 : vector<8x128xf32>
      %69 = arith.mulf %68, %68 : vector<8x128xf32>
      %70 = vector.shape_cast %69 : vector<8x128xf32> to vector<1x8x128xf32>
      %cst_53 = arith.constant dense<0.000000e+00> : vector<8x128xf32>
      %71 = vector.multi_reduction <add>, %70, %cst_53 [0] : vector<1x8x128xf32> to vector<8x128xf32>
      %72 = arith.addf %48, %71 : vector<8x128xf32>
      %73 = math.absf %68 : vector<8x128xf32>
      %74 = vector.shape_cast %73 : vector<8x128xf32> to vector<1x8x128xf32>
      %cst_54 = arith.constant dense<0.000000e+00> : vector<8x128xf32>
      %75 = vector.multi_reduction <add>, %74, %cst_54 [0] : vector<1x8x128xf32> to vector<8x128xf32>
      %76 = arith.addf %49, %75 : vector<8x128xf32>
      %77 = arith.addf %67, %63 : vector<8x128xf32>
      %78 = arith.subf %77, %59 : vector<8x128xf32>
      %79 = arith.mulf %78, %78 : vector<8x128xf32>
      %80 = vector.shape_cast %79 : vector<8x128xf32> to vector<1x8x128xf32>
      %cst_55 = arith.constant dense<0.000000e+00> : vector<8x128xf32>
      %81 = vector.multi_reduction <add>, %80, %cst_55 [0] : vector<1x8x128xf32> to vector<8x128xf32>
      %82 = arith.addf %50, %81 : vector<8x128xf32>
      %c0_56 = arith.constant 0 : index
      %c0_57 = arith.constant 0 : index
      %c0_58 = arith.constant 0 : index
      %83 = vector.load %arg6[%c0_56, %c0_57, %c0_58] : memref<1x8x128xf32, #tpu.memory_space<vmem>>, vector<1x8x128xf32>
      %84 = vector.shape_cast %83 : vector<1x8x128xf32> to vector<8x128xf32>
      %85 = arith.addf %84, %72 : vector<8x128xf32>
      %c0_59 = arith.constant 0 : index
      %c0_60 = arith.constant 0 : index
      %c0_61 = arith.constant 0 : index
      %86 = vector.load %arg6[%c0_59, %c0_60, %c0_61] : memref<1x8x128xf32, #tpu.memory_space<vmem>>, vector<1x8x128xf32>
      %87 = vector.shape_cast %86 : vector<1x8x128xf32> to vector<8x128xf32>
      %88 = vector.shape_cast %85 : vector<8x128xf32> to vector<1x8x128xf32>
      tpu.vector_store %arg6[%c0_59, %c0_60, %c0_61], %88 {strides = array<i32>} : memref<1x8x128xf32, #tpu.memory_space<vmem>>, vector<1x8x128xf32>,
      %c0_62 = arith.constant 0 : index
      %c0_63 = arith.constant 0 : index
      %c0_64 = arith.constant 0 : index
      %89 = vector.load %arg7[%c0_62, %c0_63, %c0_64] : memref<1x8x128xf32, #tpu.memory_space<vmem>>, vector<1x8x128xf32>
      %90 = vector.shape_cast %89 : vector<1x8x128xf32> to vector<8x128xf32>
      %91 = arith.addf %90, %76 : vector<8x128xf32>
      %c0_65 = arith.constant 0 : index
      %c0_66 = arith.constant 0 : index
      %c0_67 = arith.constant 0 : index
      %92 = vector.load %arg7[%c0_65, %c0_66, %c0_67] : memref<1x8x128xf32, #tpu.memory_space<vmem>>, vector<1x8x128xf32>
      %93 = vector.shape_cast %92 : vector<1x8x128xf32> to vector<8x128xf32>
      %94 = vector.shape_cast %91 : vector<8x128xf32> to vector<1x8x128xf32>
      tpu.vector_store %arg7[%c0_65, %c0_66, %c0_67], %94 {strides = array<i32>} : memref<1x8x128xf32, #tpu.memory_space<vmem>>, vector<1x8x128xf32>,
      %c0_68 = arith.constant 0 : index
      %c0_69 = arith.constant 0 : index
      %c0_70 = arith.constant 0 : index
      %95 = vector.load %arg8[%c0_68, %c0_69, %c0_70] : memref<1x8x128xf32, #tpu.memory_space<vmem>>, vector<1x8x128xf32>
      %96 = vector.shape_cast %95 : vector<1x8x128xf32> to vector<8x128xf32>
      %97 = arith.addf %96, %82 : vector<8x128xf32>
      %c0_71 = arith.constant 0 : index
      %c0_72 = arith.constant 0 : index
      %c0_73 = arith.constant 0 : index
      %98 = vector.load %arg8[%c0_71, %c0_72, %c0_73] : memref<1x8x128xf32, #tpu.memory_space<vmem>>, vector<1x8x128xf32>
      %99 = vector.shape_cast %98 : vector<1x8x128xf32> to vector<8x128xf32>
      %100 = vector.shape_cast %97 : vector<8x128xf32> to vector<1x8x128xf32>
      tpu.vector_store %arg8[%c0_71, %c0_72, %c0_73], %100 {strides = array<i32>} : memref<1x8x128xf32, #tpu.memory_space<vmem>>, vector<1x8x128xf32>,
    }
    %c7_i32_35 = arith.constant 7 : i32
    return
  }
  func.func @transform_0(%arg0: i32, %arg1: i32) -> (i32, i32, i32) {
    %c0_i32 = arith.constant 0 : i32
    %c0_i32_0 = arith.constant 0 : i32
    return %arg1, %arg0, %c0_i32 : i32, i32, i32
  }
  func.func @transform_1(%arg0: i32, %arg1: i32) -> (i32, i32, i32) {
    %c0_i32 = arith.constant 0 : i32
    %c0_i32_0 = arith.constant 0 : i32
    return %arg1, %arg0, %c0_i32 : i32, i32, i32
  }
  func.func @transform_2(%arg0: i32, %arg1: i32) -> (i32, i32, i32) {
    %c0_i32 = arith.constant 0 : i32
    %0 = arith.minsi %arg1, %c0_i32 : i32
    %c0_i32_0 = arith.constant 0 : i32
    %c0_i32_1 = arith.constant 0 : i32
    return %0, %arg0, %c0_i32_0 : i32, i32, i32
  }
  func.func @transform_3(%arg0: i32, %arg1: i32) -> (i32, i32, i32) {
    %c0_i32 = arith.constant 0 : i32
    %c0_i32_0 = arith.constant 0 : i32
    return %arg1, %arg0, %c0_i32 : i32, i32, i32
  }
  func.func @transform_4(%arg0: i32, %arg1: i32) -> (i32, i32, i32) {
    %c0_i32 = arith.constant 0 : i32
    %c0_i32_0 = arith.constant 0 : i32
    %c0_i32_1 = arith.constant 0 : i32
    return %arg0, %c0_i32, %c0_i32_0 : i32, i32, i32
  }
  func.func @transform_5(%arg0: i32, %arg1: i32) -> (i32, i32, i32) {
    %c0_i32 = arith.constant 0 : i32
    %c0_i32_0 = arith.constant 0 : i32
    %c0_i32_1 = arith.constant 0 : i32
    return %arg0, %c0_i32, %c0_i32_0 : i32, i32, i32
  }
  func.func @transform_6(%arg0: i32, %arg1: i32) -> (i32, i32, i32) {
    %c0_i32 = arith.constant 0 : i32
    %c0_i32_0 = arith.constant 0 : i32
    %c0_i32_1 = arith.constant 0 : i32
    return %arg0, %c0_i32, %c0_i32_0 : i32, i32, i32
  }
}

</mosaic_0001>

<llo_original>
// kernel: my_mse_mae_ssim_diff.1
$region0: #{my_mse_mae_ssim_diff.1}
  #allocation0 [shape = 'u32[]', space=smem, size = 0x4, offset = 0x4, fixed_abs, tag = 'smem constant byte address 0x4 - core index']
  #allocation1 [shape = 'u32[144,128]{1,0:T(1,128)}', space=vmem, size = 0x12000, scoped, tag = 'internal scratch']
  #allocation2 [shape = 'f32[8,128]{1,0:T(8,128)}', space=vmem, size = 0x1000, scoped, tag = 'scratch operand']
  %s0 = inlined_call_operand.vmem [shape: f32[8,16,128], index: 0, kind: input, shape index: {}]
  %s1 = inlined_call_operand.vmem [shape: f32[8,16,128], index: 1, kind: input, shape index: {}]
  %s2 = inlined_call_operand.vmem [shape: f32[7,16,128], index: 2, kind: input, shape index: {}]
  %s3 = inlined_call_operand.vmem [shape: f32[8,16,128], index: 3, kind: input, shape index: {}]
  %s4 = inlined_call_operand.vmem [shape: f32[2,8,128], index: 4, kind: output, shape index: {0}]
  %s5 = inlined_call_operand.vmem [shape: f32[2,8,128], index: 5, kind: output, shape index: {1}]
  %s6 = inlined_call_operand.vmem [shape: f32[2,8,128], index: 6, kind: output, shape index: {2}]
  %7 = xla_tuple %s4, %s5, %s6
  %s8 = sld [smem:[#allocation0]]
  $region228: #{my_mse_mae_ssim_diff.1} parent=0
    _
  %s10 = ssub.s32 1, %s8
  %s11 = scalar_select 0, %s10, %s8
  $region1: #{my_mse_mae_ssim_diff.1} parent=0
    #allocation3 [shape = 'u8[65536]{0}', space=vmem, size = 0x10000, scoped, tag = 'input window, operand 0']
    #allocation4 [shape = 'u8[65536]{0}', space=vmem, size = 0x10000, scoped, tag = 'input window, operand 1']
    #allocation5 [shape = 'u8[57344]{0}', space=vmem, size = 0xe000, scoped, tag = 'input window, operand 2']
    #allocation6 [shape = 'u8[65536]{0}', space=vmem, size = 0x10000, scoped, tag = 'input window, operand 3']
    loop: start=0, step=1, limit=4
    $region2: #{my_mse_mae_ssim_diff.1} parent=1 // loop_pre_header
      _
    $region3: #{my_mse_mae_ssim_diff.1} parent=1 // loop_header
      %s13 = sphi 0, %s17
      %p14 = scmp.ge.s32.totalorder %s13, 4
      %s20 = sphi 0, %s32
      %s21 = sphi 0, %s28
      %s22 = sphi 0, %s20
      %s23 = sphi 0, %s21
      %s24 = sphi 0, %s22
      %s25 = sphi 0, %s23
      %s37 = sphi 0, %s39
      %s40 = sphi 0, %s37
      %s41 = sphi 0, %s40
      %s57 = sphi 0, %s41
      %s65 = sphi 0, %s67
      %s68 = sphi 0, %s65
      %s69 = sphi 0, %s68
      %s85 = sphi 0, %s69
      %s97 = sphi 0, %s99
      %s100 = sphi 0, %s97
      %s101 = sphi 0, %s100
      %s117 = sphi 0, %s101
      %s125 = sphi 0, %s127
      %s128 = sphi 0, %s125
      %s129 = sphi 0, %s128
      %s145 = sphi 0, %s129
      %s151 = sphi 0, %s153
      %s154 = sphi 0, %s151
      %s155 = sphi 0, %s154
      %s171 = sphi 0, %s155
      %s177 = sphi 0, %s179
      %s180 = sphi 0, %s177
      %s181 = sphi 0, %s180
      %s197 = sphi 0, %s181
      %s203 = sphi 0, %s205
      %s206 = sphi 0, %s203
      %s207 = sphi 0, %s206
      %s223 = sphi 0, %s207
    $region4: #{my_mse_mae_ssim_diff.1} parent=1 // loop_header_branch
      %16 = sbr.rel (%p14) target = $region8
    $region5: #{my_mse_mae_ssim_diff.1} parent=1 // loop_body
      %s18 = ssub.s32 %s13, 1
      %s19 = ssub.s32 %s13, 2
      %s26 = sadd.s32 1, %s21
      %p27 = scmp.ge.s32.totalorder %s26, 1
      %s28 = scalar_select %p27, 0, %s26
      %s29 = sadd.s32 1, %s20
      %s30 = scalar_select %p27, %s29, %s20
      %p31 = scmp.ge.s32.totalorder %s30, 2
      %s32 = scalar_select %p31, 0, %s30
      %s33 = ssub.s32 %s21, %s28
      %s34 = ssub.s32 %s20, %s32
      %s35 = sor.u32 %s33, %s34
      %p36 = scmp.eq.s32.totalorder %s35, 0
      %s38 = sadd.s32 %s37, 1
      %s39 = scalar_select %p36, %s37, %s38
      %p42 = pneg %p36
      %p43 = scmp.eq.s32.totalorder %s13, 1
      %p44 = por %p42, %p43
      %p45 = scmp.ne.s32.totalorder %s37, %s40
      %p46 = scmp.eq.s32.totalorder %s13, 0
      %p47 = por %p45, %p46
      %p48 = scmp.ne.s32.totalorder %s37, %s40
      %p49 = scmp.eq.s32.totalorder %s18, 1
      %p50 = por %p48, %p49
      %p51 = scmp.ne.s32.totalorder %s40, %s41
      %p52 = scmp.eq.s32.totalorder %s18, 0
      %p53 = por %p51, %p52
      %p54 = scmp.ne.s32.totalorder %s40, %s41
      %p55 = scmp.eq.s32.totalorder %s19, 1
      %p56 = por %p54, %p55
      %p58 = scmp.ne.s32.totalorder %s41, %s57
      %p59 = scmp.eq.s32.totalorder %s19, 0
      %p60 = por %p58, %p59
      %s61 = ssub.s32 %s21, %s28
      %s62 = ssub.s32 %s20, %s32
      %s63 = sor.u32 %s61, %s62
      %p64 = scmp.eq.s32.totalorder %s63, 0
      %s66 = sadd.s32 %s65, 1
      %s67 = scalar_select %p64, %s65, %s66
      %p70 = pneg %p64
      %p71 = scmp.eq.s32.totalorder %s13, 1
      %p72 = por %p70, %p71
      %p73 = scmp.ne.s32.totalorder %s65, %s68
      %p74 = scmp.eq.s32.totalorder %s13, 0
      %p75 = por %p73, %p74
      %p76 = scmp.ne.s32.totalorder %s65, %s68
      %p77 = scmp.eq.s32.totalorder %s18, 1
      %p78 = por %p76, %p77
      %p79 = scmp.ne.s32.totalorder %s68, %s69
      %p80 = scmp.eq.s32.totalorder %s18, 0
      %p81 = por %p79, %p80
      %p82 = scmp.ne.s32.totalorder %s68, %s69
      %p83 = scmp.eq.s32.totalorder %s19, 1
      %p84 = por %p82, %p83
      %p86 = scmp.ne.s32.totalorder %s69, %s85
      %p87 = scmp.eq.s32.totalorder %s19, 0
      %p88 = por %p86, %p87
      %p89 = scmp.lt.s32.totalorder %s21, 0
      %s90 = scalar_select %p89, %s21, 0
      %p91 = scmp.lt.s32.totalorder %s28, 0
      %s92 = scalar_select %p91, %s28, 0
      %s93 = ssub.s32 %s90, %s92
      %s94 = ssub.s32 %s20, %s32
      %s95 = sor.u32 %s93, %s94
      %p96 = scmp.eq.s32.totalorder %s95, 0
      %s98 = sadd.s32 %s97, 1
      %s99 = scalar_select %p96, %s97, %s98
      %p102 = pneg %p96
      %p103 = scmp.eq.s32.totalorder %s13, 1
      %p104 = por %p102, %p103
      %p105 = scmp.ne.s32.totalorder %s97, %s100
      %p106 = scmp.eq.s32.totalorder %s13, 0
      %p107 = por %p105, %p106
      %p108 = scmp.ne.s32.totalorder %s97, %s100
      %p109 = scmp.eq.s32.totalorder %s18, 1
      %p110 = por %p108, %p109
      %p111 = scmp.ne.s32.totalorder %s100, %s101
      %p112 = scmp.eq.s32.totalorder %s18, 0
      %p113 = por %p111, %p112
      %p114 = scmp.ne.s32.totalorder %s100, %s101
      %p115 = scmp.eq.s32.totalorder %s19, 1
      %p116 = por %p114, %p115
      %p118 = scmp.ne.s32.totalorder %s101, %s117
      %p119 = scmp.eq.s32.totalorder %s19, 0
      %p120 = por %p118, %p119
      %s121 = ssub.s32 %s21, %s28
      %s122 = ssub.s32 %s20, %s32
      %s123 = sor.u32 %s121, %s122
      %p124 = scmp.eq.s32.totalorder %s123, 0
      %s126 = sadd.s32 %s125, 1
      %s127 = scalar_select %p124, %s125, %s126
      %p130 = pneg %p124
      %p131 = scmp.eq.s32.totalorder %s13, 1
      %p132 = por %p130, %p131
      %p133 = scmp.ne.s32.totalorder %s125, %s128
      %p134 = scmp.eq.s32.totalorder %s13, 0
      %p135 = por %p133, %p134
      %p136 = scmp.ne.s32.totalorder %s125, %s128
      %p137 = scmp.eq.s32.totalorder %s18, 1
      %p138 = por %p136, %p137
      %p139 = scmp.ne.s32.totalorder %s128, %s129
      %p140 = scmp.eq.s32.totalorder %s18, 0
      %p141 = por %p139, %p140
      %p142 = scmp.ne.s32.totalorder %s128, %s129
      %p143 = scmp.eq.s32.totalorder %s19, 1
      %p144 = por %p142, %p143
      %p146 = scmp.ne.s32.totalorder %s129, %s145
      %p147 = scmp.eq.s32.totalorder %s19, 0
      %p148 = por %p146, %p147
      %s149 = ssub.s32 %s20, %s32
      %p150 = scmp.eq.s32.totalorder %s149, 0
      %s152 = sadd.s32 %s151, 1
      %s153 = scalar_select %p150, %s151, %s152
      %p156 = pneg %p150
      %p157 = scmp.eq.s32.totalorder %s13, 1
      %p158 = por %p156, %p157
      %p159 = scmp.ne.s32.totalorder %s151, %s154
      %p160 = scmp.eq.s32.totalorder %s13, 0
      %p161 = por %p159, %p160
      %p162 = scmp.ne.s32.totalorder %s151, %s154
      %p163 = scmp.eq.s32.totalorder %s18, 1
      %p164 = por %p162, %p163
      %p165 = scmp.ne.s32.totalorder %s154, %s155
      %p166 = scmp.eq.s32.totalorder %s18, 0
      %p167 = por %p165, %p166
      %p168 = scmp.ne.s32.totalorder %s154, %s155
      %p169 = scmp.eq.s32.totalorder %s19, 1
      %p170 = por %p168, %p169
      %p172 = scmp.ne.s32.totalorder %s155, %s171
      %p173 = scmp.eq.s32.totalorder %s19, 0
      %p174 = por %p172, %p173
      %s175 = ssub.s32 %s20, %s32
      %p176 = scmp.eq.s32.totalorder %s175, 0
      %s178 = sadd.s32 %s177, 1
      %s179 = scalar_select %p176, %s177, %s178
      %p182 = pneg %p176
      %p183 = scmp.eq.s32.totalorder %s13, 1
      %p184 = por %p182, %p183
      %p185 = scmp.ne.s32.totalorder %s177, %s180
      %p186 = scmp.eq.s32.totalorder %s13, 0
      %p187 = por %p185, %p186
      %p188 = scmp.ne.s32.totalorder %s177, %s180
      %p189 = scmp.eq.s32.totalorder %s18, 1
      %p190 = por %p188, %p189
      %p191 = scmp.ne.s32.totalorder %s180, %s181
      %p192 = scmp.eq.s32.totalorder %s18, 0
      %p193 = por %p191, %p192
      %p194 = scmp.ne.s32.totalorder %s180, %s181
      %p195 = scmp.eq.s32.totalorder %s19, 1
      %p196 = por %p194, %p195
      %p198 = scmp.ne.s32.totalorder %s181, %s197
      %p199 = scmp.eq.s32.totalorder %s19, 0
      %p200 = por %p198, %p199
      %s201 = ssub.s32 %s20, %s32
      %p202 = scmp.eq.s32.totalorder %s201, 0
      %s204 = sadd.s32 %s203, 1
      %s205 = scalar_select %p202, %s203, %s204
      %p208 = pneg %p202
      %p209 = scmp.eq.s32.totalorder %s13, 1
      %p210 = por %p208, %p209
      %p211 = scmp.ne.s32.totalorder %s203, %s206
      %p212 = scmp.eq.s32.totalorder %s13, 0
      %p213 = por %p211, %p212
      %p214 = scmp.ne.s32.totalorder %s203, %s206
      %p215 = scmp.eq.s32.totalorder %s18, 1
      %p216 = por %p214, %p215
      %p217 = scmp.ne.s32.totalorder %s206, %s207
      %p218 = scmp.eq.s32.totalorder %s18, 0
      %p219 = por %p217, %p218
      %p220 = scmp.ne.s32.totalorder %s206, %s207
      %p221 = scmp.eq.s32.totalorder %s19, 1
      %p222 = por %p220, %p221
      %p224 = scmp.ne.s32.totalorder %s207, %s223
      %p225 = scmp.eq.s32.totalorder %s19, 0
      %p226 = por %p224, %p225
      %p227 = scmp.le.s32.totalorder 1, %s13
      %p228 = scmp.lt.s32.totalorder %s13, 3
      %p229 = pnand %p227, %p228
      %p230 = pneg %p229
      // Predicated region
      $region9: #{my_mse_mae_ssim_diff.1} parent=5 // pred_check
        _
      $region10: #{my_mse_mae_ssim_diff.1} parent=5 // pred_check_branch
        %232 = sbr.rel (%p229) target = $region12
      $region11: #{my_mse_mae_ssim_diff.1} parent=5 // pred_region
        %s233 = ssub.s32 %s13, 1
      $region12: #{my_mse_mae_ssim_diff.1} parent=5 // pred_fallthru
        _
      %p234 = scmp.lt.s32.totalorder %s13, 2
      // Predicated region
      $region13: #{my_mse_mae_ssim_diff.1} parent=5 // pred_check
        %p235 = pneg %p234
      $region14: #{my_mse_mae_ssim_diff.1} parent=5 // pred_check_branch
        %237 = sbr.rel (%p235) target = $region16
      $region15: #{my_mse_mae_ssim_diff.1} parent=5 // pred_region
        // Predicated region
        $region17: #{my_mse_mae_ssim_diff.1} parent=15 // pred_check
          %p238 = pneg %p47
        $region18: #{my_mse_mae_ssim_diff.1} parent=15 // pred_check_branch
          %240 = sbr.rel (%p238) target = $region20
        $region19: #{my_mse_mae_ssim_diff.1} parent=15 // pred_region
          %s241 = sand.u32 %s37, 1
          %s242 = sand.u32 %s37, 1
          %s243 = smul.addr %s242, 64
          %s244 = scalar_lea.vmem [#allocation3], %s243
          %s245 = smul.u32 8, %s21
          %s246 = smul.addr %s245, 2
          %s247 = sadd.s32 %s20, %s246
          %s248 = smul.addr %s247, 8
          %s249 = scalar_lea.vmem %s0, %s248
          // Predicated region
          $region21: #{my_mse_mae_ssim_diff.1} parent=19 // pred_check
            _
          $region22: #{my_mse_mae_ssim_diff.1} parent=19 // pred_check_branch
            %251 = sbr.rel (0) target = $region24
          $region23: #{my_mse_mae_ssim_diff.1} parent=19 // pred_region
            // Predicated region
            $region25: #{my_mse_mae_ssim_diff.1} parent=23 // pred_check
              _
            $region26: #{my_mse_mae_ssim_diff.1} parent=23 // pred_check_branch
              %253 = sbr.rel (0) target = $region28
            $region27: #{my_mse_mae_ssim_diff.1} parent=23 // pred_region
              // Predicated region
              $region40: #{my_mse_mae_ssim_diff.1} parent=27 // pred_check
                _
              $region41: #{my_mse_mae_ssim_diff.1} parent=27 // pred_check_branch
                %283 = sbr.rel (0) target = $region43
              $region42: #{my_mse_mae_ssim_diff.1} parent=27 // pred_region
                loop: start=0, step=1, limit=1
                $region44: #{my_mse_mae_ssim_diff.1} parent=42 // loop_pre_header
                  _
                $region45: #{my_mse_mae_ssim_diff.1} parent=42 // loop_header
                  %s285 = sphi 0, %s289
                  %p286 = scmp.ge.s32.totalorder %s285, 1
                  %s290 = sphi %s249, %s249
                  %s291 = sphi %s244, %s244
                $region46: #{my_mse_mae_ssim_diff.1} parent=42 // loop_header_branch
                  %288 = sbr.rel (%p286) target = $region50
                $region47: #{my_mse_mae_ssim_diff.1} parent=42 // loop_body
                  %v292 = vld [vmem:[%s290] sm:$0xff]
                  %293 = vst [vmem:[%s291] sm:$0xff] %v292
                  %v294 = vld [vmem:[%s290 + $0x10] sm:$0xff]
                  %295 = vst [vmem:[%s291 + $0x8] sm:$0xff] %v294
                  %v296 = vld [vmem:[%s290 + $0x20] sm:$0xff]
                  %297 = vst [vmem:[%s291 + $0x10] sm:$0xff] %v296
                  %v298 = vld [vmem:[%s290 + $0x30] sm:$0xff]
                  %299 = vst [vmem:[%s291 + $0x18] sm:$0xff] %v298
                  %v300 = vld [vmem:[%s290 + $0x40] sm:$0xff]
                  %301 = vst [vmem:[%s291 + $0x20] sm:$0xff] %v300
                  %v302 = vld [vmem:[%s290 + $0x50] sm:$0xff]
                  %303 = vst [vmem:[%s291 + $0x28] sm:$0xff] %v302
                  %v304 = vld [vmem:[%s290 + $0x60] sm:$0xff]
                  %305 = vst [vmem:[%s291 + $0x30] sm:$0xff] %v304
                  %v306 = vld [vmem:[%s290 + $0x70] sm:$0xff]
                  %307 = vst [vmem:[%s291 + $0x38] sm:$0xff] %v306
                $region48: #{my_mse_mae_ssim_diff.1} parent=42 // loop_footer
                  %s289 = sadd.s32 1, %s285
                $region49: #{my_mse_mae_ssim_diff.1} parent=42 // loop_footer_branch
                  %284 = sbr.rel target = $region45
                $region50: #{my_mse_mae_ssim_diff.1} parent=42 // loop_exit
                  _
              $region43: #{my_mse_mae_ssim_diff.1} parent=27 // pred_fallthru
                _
              // Predicated region
              $region51: #{my_mse_mae_ssim_diff.1} parent=27 // pred_check
                _
              $region52: #{my_mse_mae_ssim_diff.1} parent=27 // pred_check_branch
                %309 = sbr.rel target = $region54
              $region53: #{my_mse_mae_ssim_diff.1} parent=27 // pred_region
                _
              $region54: #{my_mse_mae_ssim_diff.1} parent=27 // pred_fallthru
                _
            $region28: #{my_mse_mae_ssim_diff.1} parent=23 // pred_fallthru
              _
            // Predicated region
            $region29: #{my_mse_mae_ssim_diff.1} parent=23 // pred_check
              _
            $region30: #{my_mse_mae_ssim_diff.1} parent=23 // pred_check_branch
              %255 = sbr.rel target = $region32
            $region31: #{my_mse_mae_ssim_diff.1} parent=23 // pred_region
              %s257 = ssub.s32 256, 1
              loop: start=0, step=1, limit=1
              $region33: #{my_mse_mae_ssim_diff.1} parent=31 // loop_pre_header
                _
              $region34: #{my_mse_mae_ssim_diff.1} parent=31 // loop_header
                %s259 = sphi 0, %s263
                %p260 = scmp.ge.s32.totalorder %s259, 1
                %s264 = sphi %s249, %s249
                %s265 = sphi %s244, %s244
              $region35: #{my_mse_mae_ssim_diff.1} parent=31 // loop_header_branch
                %262 = sbr.rel (%p260) target = $region39
              $region36: #{my_mse_mae_ssim_diff.1} parent=31 // loop_body
                %v266 = vld [vmem:[%s264] sm:%s257]
                %267 = vst [vmem:[%s265] sm:%s257] %v266
                %v268 = vld [vmem:[%s264 + $0x10] sm:%s257]
                %269 = vst [vmem:[%s265 + $0x8] sm:%s257] %v268
                %v270 = vld [vmem:[%s264 + $0x20] sm:%s257]
                %271 = vst [vmem:[%s265 + $0x10] sm:%s257] %v270
                %v272 = vld [vmem:[%s264 + $0x30] sm:%s257]
                %273 = vst [vmem:[%s265 + $0x18] sm:%s257] %v272
                %v274 = vld [vmem:[%s264 + $0x40] sm:%s257]
                %275 = vst [vmem:[%s265 + $0x20] sm:%s257] %v274
                %v276 = vld [vmem:[%s264 + $0x50] sm:%s257]
                %277 = vst [vmem:[%s265 + $0x28] sm:%s257] %v276
                %v278 = vld [vmem:[%s264 + $0x60] sm:%s257]
                %279 = vst [vmem:[%s265 + $0x30] sm:%s257] %v278
                %v280 = vld [vmem:[%s264 + $0x70] sm:%s257]
                %281 = vst [vmem:[%s265 + $0x38] sm:%s257] %v280
              $region37: #{my_mse_mae_ssim_diff.1} parent=31 // loop_footer
                %s263 = sadd.s32 1, %s259
              $region38: #{my_mse_mae_ssim_diff.1} parent=31 // loop_footer_branch
                %258 = sbr.rel target = $region34
              $region39: #{my_mse_mae_ssim_diff.1} parent=31 // loop_exit
                _
            $region32: #{my_mse_mae_ssim_diff.1} parent=23 // pred_fallthru
              _
          $region24: #{my_mse_mae_ssim_diff.1} parent=19 // pred_fallthru
            _
          %310 = vnop
        $region20: #{my_mse_mae_ssim_diff.1} parent=15 // pred_fallthru
          _
        // Predicated region
        $region55: #{my_mse_mae_ssim_diff.1} parent=15 // pred_check
          %p311 = pneg %p75
        $region56: #{my_mse_mae_ssim_diff.1} parent=15 // pred_check_branch
          %313 = sbr.rel (%p311) target = $region58
        $region57: #{my_mse_mae_ssim_diff.1} parent=15 // pred_region
          %s314 = sand.u32 %s65, 1
          %s315 = sand.u32 %s65, 1
          %s316 = smul.addr %s315, 64
          %s317 = scalar_lea.vmem [#allocation4], %s316
          %s318 = smul.u32 8, %s21
          %s319 = smul.addr %s318, 2
          %s320 = sadd.s32 %s20, %s319
          %s321 = smul.addr %s320, 8
          %s322 = scalar_lea.vmem %s1, %s321
          // Predicated region
          $region59: #{my_mse_mae_ssim_diff.1} parent=57 // pred_check
            _
          $region60: #{my_mse_mae_ssim_diff.1} parent=57 // pred_check_branch
            %324 = sbr.rel (0) target = $region62
          $region61: #{my_mse_mae_ssim_diff.1} parent=57 // pred_region
            // Predicated region
            $region63: #{my_mse_mae_ssim_diff.1} parent=61 // pred_check
              _
            $region64: #{my_mse_mae_ssim_diff.1} parent=61 // pred_check_branch
              %326 = sbr.rel (0) target = $region66
            $region65: #{my_mse_mae_ssim_diff.1} parent=61 // pred_region
              // Predicated region
              $region78: #{my_mse_mae_ssim_diff.1} parent=65 // pred_check
                _
              $region79: #{my_mse_mae_ssim_diff.1} parent=65 // pred_check_branch
                %356 = sbr.rel (0) target = $region81
              $region80: #{my_mse_mae_ssim_diff.1} parent=65 // pred_region
                loop: start=0, step=1, limit=1
                $region82: #{my_mse_mae_ssim_diff.1} parent=80 // loop_pre_header
                  _
                $region83: #{my_mse_mae_ssim_diff.1} parent=80 // loop_header
                  %s358 = sphi 0, %s362
                  %p359 = scmp.ge.s32.totalorder %s358, 1
                  %s363 = sphi %s322, %s322
                  %s364 = sphi %s317, %s317
                $region84: #{my_mse_mae_ssim_diff.1} parent=80 // loop_header_branch
                  %361 = sbr.rel (%p359) target = $region88
                $region85: #{my_mse_mae_ssim_diff.1} parent=80 // loop_body
                  %v365 = vld [vmem:[%s363] sm:$0xff]
                  %366 = vst [vmem:[%s364] sm:$0xff] %v365
                  %v367 = vld [vmem:[%s363 + $0x10] sm:$0xff]
                  %368 = vst [vmem:[%s364 + $0x8] sm:$0xff] %v367
                  %v369 = vld [vmem:[%s363 + $0x20] sm:$0xff]
                  %370 = vst [vmem:[%s364 + $0x10] sm:$0xff] %v369
                  %v371 = vld [vmem:[%s363 + $0x30] sm:$0xff]
                  %372 = vst [vmem:[%s364 + $0x18] sm:$0xff] %v371
                  %v373 = vld [vmem:[%s363 + $0x40] sm:$0xff]
                  %374 = vst [vmem:[%s364 + $0x20] sm:$0xff] %v373
                  %v375 = vld [vmem:[%s363 + $0x50] sm:$0xff]
                  %376 = vst [vmem:[%s364 + $0x28] sm:$0xff] %v375
                  %v377 = vld [vmem:[%s363 + $0x60] sm:$0xff]
                  %378 = vst [vmem:[%s364 + $0x30] sm:$0xff] %v377
                  %v379 = vld [vmem:[%s363 + $0x70] sm:$0xff]
                  %380 = vst [vmem:[%s364 + $0x38] sm:$0xff] %v379
                $region86: #{my_mse_mae_ssim_diff.1} parent=80 // loop_footer
                  %s362 = sadd.s32 1, %s358
                $region87: #{my_mse_mae_ssim_diff.1} parent=80 // loop_footer_branch
                  %357 = sbr.rel target = $region83
                $region88: #{my_mse_mae_ssim_diff.1} parent=80 // loop_exit
                  _
              $region81: #{my_mse_mae_ssim_diff.1} parent=65 // pred_fallthru
                _
              // Predicated region
              $region89: #{my_mse_mae_ssim_diff.1} parent=65 // pred_check
                _
              $region90: #{my_mse_mae_ssim_diff.1} parent=65 // pred_check_branch
                %382 = sbr.rel target = $region92
              $region91: #{my_mse_mae_ssim_diff.1} parent=65 // pred_region
                _
              $region92: #{my_mse_mae_ssim_diff.1} parent=65 // pred_fallthru
                _
            $region66: #{my_mse_mae_ssim_diff.1} parent=61 // pred_fallthru
              _
            // Predicated region
            $region67: #{my_mse_mae_ssim_diff.1} parent=61 // pred_check
              _
            $region68: #{my_mse_mae_ssim_diff.1} parent=61 // pred_check_branch
              %328 = sbr.rel target = $region70
            $region69: #{my_mse_mae_ssim_diff.1} parent=61 // pred_region
              %s330 = ssub.s32 256, 1
              loop: start=0, step=1, limit=1
              $region71: #{my_mse_mae_ssim_diff.1} parent=69 // loop_pre_header
                _
              $region72: #{my_mse_mae_ssim_diff.1} parent=69 // loop_header
                %s332 = sphi 0, %s336
                %p333 = scmp.ge.s32.totalorder %s332, 1
                %s337 = sphi %s322, %s322
                %s338 = sphi %s317, %s317
              $region73: #{my_mse_mae_ssim_diff.1} parent=69 // loop_header_branch
                %335 = sbr.rel (%p333) target = $region77
              $region74: #{my_mse_mae_ssim_diff.1} parent=69 // loop_body
                %v339 = vld [vmem:[%s337] sm:%s330]
                %340 = vst [vmem:[%s338] sm:%s330] %v339
                %v341 = vld [vmem:[%s337 + $0x10] sm:%s330]
                %342 = vst [vmem:[%s338 + $0x8] sm:%s330] %v341
                %v343 = vld [vmem:[%s337 + $0x20] sm:%s330]
                %344 = vst [vmem:[%s338 + $0x10] sm:%s330] %v343
                %v345 = vld [vmem:[%s337 + $0x30] sm:%s330]
                %346 = vst [vmem:[%s338 + $0x18] sm:%s330] %v345
                %v347 = vld [vmem:[%s337 + $0x40] sm:%s330]
                %348 = vst [vmem:[%s338 + $0x20] sm:%s330] %v347
                %v349 = vld [vmem:[%s337 + $0x50] sm:%s330]
                %350 = vst [vmem:[%s338 + $0x28] sm:%s330] %v349
                %v351 = vld [vmem:[%s337 + $0x60] sm:%s330]
                %352 = vst [vmem:[%s338 + $0x30] sm:%s330] %v351
                %v353 = vld [vmem:[%s337 + $0x70] sm:%s330]
                %354 = vst [vmem:[%s338 + $0x38] sm:%s330] %v353
              $region75: #{my_mse_mae_ssim_diff.1} parent=69 // loop_footer
                %s336 = sadd.s32 1, %s332
              $region76: #{my_mse_mae_ssim_diff.1} parent=69 // loop_footer_branch
                %331 = sbr.rel target = $region72
              $region77: #{my_mse_mae_ssim_diff.1} parent=69 // loop_exit
                _
            $region70: #{my_mse_mae_ssim_diff.1} parent=61 // pred_fallthru
              _
          $region62: #{my_mse_mae_ssim_diff.1} parent=57 // pred_fallthru
            _
          %383 = vnop
        $region58: #{my_mse_mae_ssim_diff.1} parent=15 // pred_fallthru
          _
        // Predicated region
        $region93: #{my_mse_mae_ssim_diff.1} parent=15 // pred_check
          %p384 = pneg %p107
        $region94: #{my_mse_mae_ssim_diff.1} parent=15 // pred_check_branch
          %386 = sbr.rel (%p384) target = $region96
        $region95: #{my_mse_mae_ssim_diff.1} parent=15 // pred_region
          %s387 = sand.u32 %s97, 1
          %s388 = sand.u32 %s97, 1
          %s389 = smul.addr %s388, 56
          %s390 = scalar_lea.vmem [#allocation5], %s389
          %p391 = scmp.lt.s32.totalorder %s21, 0
          %s392 = scalar_select %p391, %s21, 0
          %s393 = smul.u32 7, %s392
          %s394 = smul.addr %s393, 2
          %s395 = sadd.s32 %s20, %s394
          %s396 = smul.addr %s395, 8
          %s397 = scalar_lea.vmem %s2, %s396
          // Predicated region
          $region97: #{my_mse_mae_ssim_diff.1} parent=95 // pred_check
            _
          $region98: #{my_mse_mae_ssim_diff.1} parent=95 // pred_check_branch
            %399 = sbr.rel (0) target = $region100
          $region99: #{my_mse_mae_ssim_diff.1} parent=95 // pred_region
            // Predicated region
            $region101: #{my_mse_mae_ssim_diff.1} parent=99 // pred_check
              _
            $region102: #{my_mse_mae_ssim_diff.1} parent=99 // pred_check_branch
              %401 = sbr.rel (0) target = $region104
            $region103: #{my_mse_mae_ssim_diff.1} parent=99 // pred_region
              // Predicated region
              $region116: #{my_mse_mae_ssim_diff.1} parent=103 // pred_check
                _
              $region117: #{my_mse_mae_ssim_diff.1} parent=103 // pred_check_branch
                %429 = sbr.rel (0) target = $region119
              $region118: #{my_mse_mae_ssim_diff.1} parent=103 // pred_region
                loop: start=0, step=1, limit=1
                $region120: #{my_mse_mae_ssim_diff.1} parent=118 // loop_pre_header
                  _
                $region121: #{my_mse_mae_ssim_diff.1} parent=118 // loop_header
                  %s431 = sphi 0, %s435
                  %p432 = scmp.ge.s32.totalorder %s431, 1
                  %s436 = sphi %s397, %s397
                  %s437 = sphi %s390, %s390
                $region122: #{my_mse_mae_ssim_diff.1} parent=118 // loop_header_branch
                  %434 = sbr.rel (%p432) target = $region126
                $region123: #{my_mse_mae_ssim_diff.1} parent=118 // loop_body
                  %v438 = vld [vmem:[%s436] sm:$0xff]
                  %439 = vst [vmem:[%s437] sm:$0xff] %v438
                  %v440 = vld [vmem:[%s436 + $0x10] sm:$0xff]
                  %441 = vst [vmem:[%s437 + $0x8] sm:$0xff] %v440
                  %v442 = vld [vmem:[%s436 + $0x20] sm:$0xff]
                  %443 = vst [vmem:[%s437 + $0x10] sm:$0xff] %v442
                  %v444 = vld [vmem:[%s436 + $0x30] sm:$0xff]
                  %445 = vst [vmem:[%s437 + $0x18] sm:$0xff] %v444
                  %v446 = vld [vmem:[%s436 + $0x40] sm:$0xff]
                  %447 = vst [vmem:[%s437 + $0x20] sm:$0xff] %v446
                  %v448 = vld [vmem:[%s436 + $0x50] sm:$0xff]
                  %449 = vst [vmem:[%s437 + $0x28] sm:$0xff] %v448
                  %v450 = vld [vmem:[%s436 + $0x60] sm:$0xff]
                  %451 = vst [vmem:[%s437 + $0x30] sm:$0xff] %v450
                $region124: #{my_mse_mae_ssim_diff.1} parent=118 // loop_footer
                  %s435 = sadd.s32 1, %s431
                $region125: #{my_mse_mae_ssim_diff.1} parent=118 // loop_footer_branch
                  %430 = sbr.rel target = $region121
                $region126: #{my_mse_mae_ssim_diff.1} parent=118 // loop_exit
                  _
              $region119: #{my_mse_mae_ssim_diff.1} parent=103 // pred_fallthru
                _
              // Predicated region
              $region127: #{my_mse_mae_ssim_diff.1} parent=103 // pred_check
                _
              $region128: #{my_mse_mae_ssim_diff.1} parent=103 // pred_check_branch
                %453 = sbr.rel target = $region130
              $region129: #{my_mse_mae_ssim_diff.1} parent=103 // pred_region
                _
              $region130: #{my_mse_mae_ssim_diff.1} parent=103 // pred_fallthru
                _
            $region104: #{my_mse_mae_ssim_diff.1} parent=99 // pred_fallthru
              _
            // Predicated region
            $region105: #{my_mse_mae_ssim_diff.1} parent=99 // pred_check
              _
            $region106: #{my_mse_mae_ssim_diff.1} parent=99 // pred_check_branch
              %403 = sbr.rel target = $region108
            $region107: #{my_mse_mae_ssim_diff.1} parent=99 // pred_region
              %s405 = ssub.s32 256, 1
              loop: start=0, step=1, limit=1
              $region109: #{my_mse_mae_ssim_diff.1} parent=107 // loop_pre_header
                _
              $region110: #{my_mse_mae_ssim_diff.1} parent=107 // loop_header
                %s407 = sphi 0, %s411
                %p408 = scmp.ge.s32.totalorder %s407, 1
                %s412 = sphi %s397, %s397
                %s413 = sphi %s390, %s390
              $region111: #{my_mse_mae_ssim_diff.1} parent=107 // loop_header_branch
                %410 = sbr.rel (%p408) target = $region115
              $region112: #{my_mse_mae_ssim_diff.1} parent=107 // loop_body
                %v414 = vld [vmem:[%s412] sm:%s405]
                %415 = vst [vmem:[%s413] sm:%s405] %v414
                %v416 = vld [vmem:[%s412 + $0x10] sm:%s405]
                %417 = vst [vmem:[%s413 + $0x8] sm:%s405] %v416
                %v418 = vld [vmem:[%s412 + $0x20] sm:%s405]
                %419 = vst [vmem:[%s413 + $0x10] sm:%s405] %v418
                %v420 = vld [vmem:[%s412 + $0x30] sm:%s405]
                %421 = vst [vmem:[%s413 + $0x18] sm:%s405] %v420
                %v422 = vld [vmem:[%s412 + $0x40] sm:%s405]
                %423 = vst [vmem:[%s413 + $0x20] sm:%s405] %v422
                %v424 = vld [vmem:[%s412 + $0x50] sm:%s405]
                %425 = vst [vmem:[%s413 + $0x28] sm:%s405] %v424
                %v426 = vld [vmem:[%s412 + $0x60] sm:%s405]
                %427 = vst [vmem:[%s413 + $0x30] sm:%s405] %v426
              $region113: #{my_mse_mae_ssim_diff.1} parent=107 // loop_footer
                %s411 = sadd.s32 1, %s407
              $region114: #{my_mse_mae_ssim_diff.1} parent=107 // loop_footer_branch
                %406 = sbr.rel target = $region110
              $region115: #{my_mse_mae_ssim_diff.1} parent=107 // loop_exit
                _
            $region108: #{my_mse_mae_ssim_diff.1} parent=99 // pred_fallthru
              _
          $region100: #{my_mse_mae_ssim_diff.1} parent=95 // pred_fallthru
            _
          %454 = vnop
        $region96: #{my_mse_mae_ssim_diff.1} parent=15 // pred_fallthru
          _
        // Predicated region
        $region131: #{my_mse_mae_ssim_diff.1} parent=15 // pred_check
          %p455 = pneg %p135
        $region132: #{my_mse_mae_ssim_diff.1} parent=15 // pred_check_branch
          %457 = sbr.rel (%p455) target = $region134
        $region133: #{my_mse_mae_ssim_diff.1} parent=15 // pred_region
          %s458 = sand.u32 %s125, 1
          %s459 = sand.u32 %s125, 1
          %s460 = smul.addr %s459, 64
          %s461 = scalar_lea.vmem [#allocation6], %s460
          %s462 = smul.u32 8, %s21
          %s463 = smul.addr %s462, 2
          %s464 = sadd.s32 %s20, %s463
          %s465 = smul.addr %s464, 8
          %s466 = scalar_lea.vmem %s3, %s465
          // Predicated region
          $region135: #{my_mse_mae_ssim_diff.1} parent=133 // pred_check
            _
          $region136: #{my_mse_mae_ssim_diff.1} parent=133 // pred_check_branch
            %468 = sbr.rel (0) target = $region138
          $region137: #{my_mse_mae_ssim_diff.1} parent=133 // pred_region
            // Predicated region
            $region139: #{my_mse_mae_ssim_diff.1} parent=137 // pred_check
              _
            $region140: #{my_mse_mae_ssim_diff.1} parent=137 // pred_check_branch
              %470 = sbr.rel (0) target = $region142
            $region141: #{my_mse_mae_ssim_diff.1} parent=137 // pred_region
              // Predicated region
              $region154: #{my_mse_mae_ssim_diff.1} parent=141 // pred_check
                _
              $region155: #{my_mse_mae_ssim_diff.1} parent=141 // pred_check_branch
                %500 = sbr.rel (0) target = $region157
              $region156: #{my_mse_mae_ssim_diff.1} parent=141 // pred_region
                loop: start=0, step=1, limit=1
                $region158: #{my_mse_mae_ssim_diff.1} parent=156 // loop_pre_header
                  _
                $region159: #{my_mse_mae_ssim_diff.1} parent=156 // loop_header
                  %s502 = sphi 0, %s506
                  %p503 = scmp.ge.s32.totalorder %s502, 1
                  %s507 = sphi %s466, %s466
                  %s508 = sphi %s461, %s461
                $region160: #{my_mse_mae_ssim_diff.1} parent=156 // loop_header_branch
                  %505 = sbr.rel (%p503) target = $region164
                $region161: #{my_mse_mae_ssim_diff.1} parent=156 // loop_body
                  %v509 = vld [vmem:[%s507] sm:$0xff]
                  %510 = vst [vmem:[%s508] sm:$0xff] %v509
                  %v511 = vld [vmem:[%s507 + $0x10] sm:$0xff]
                  %512 = vst [vmem:[%s508 + $0x8] sm:$0xff] %v511
                  %v513 = vld [vmem:[%s507 + $0x20] sm:$0xff]
                  %514 = vst [vmem:[%s508 + $0x10] sm:$0xff] %v513
                  %v515 = vld [vmem:[%s507 + $0x30] sm:$0xff]
                  %516 = vst [vmem:[%s508 + $0x18] sm:$0xff] %v515
                  %v517 = vld [vmem:[%s507 + $0x40] sm:$0xff]
                  %518 = vst [vmem:[%s508 + $0x20] sm:$0xff] %v517
                  %v519 = vld [vmem:[%s507 + $0x50] sm:$0xff]
                  %520 = vst [vmem:[%s508 + $0x28] sm:$0xff] %v519
                  %v521 = vld [vmem:[%s507 + $0x60] sm:$0xff]
                  %522 = vst [vmem:[%s508 + $0x30] sm:$0xff] %v521
                  %v523 = vld [vmem:[%s507 + $0x70] sm:$0xff]
                  %524 = vst [vmem:[%s508 + $0x38] sm:$0xff] %v523
                $region162: #{my_mse_mae_ssim_diff.1} parent=156 // loop_footer
                  %s506 = sadd.s32 1, %s502
                $region163: #{my_mse_mae_ssim_diff.1} parent=156 // loop_footer_branch
                  %501 = sbr.rel target = $region159
                $region164: #{my_mse_mae_ssim_diff.1} parent=156 // loop_exit
                  _
              $region157: #{my_mse_mae_ssim_diff.1} parent=141 // pred_fallthru
                _
              // Predicated region
              $region165: #{my_mse_mae_ssim_diff.1} parent=141 // pred_check
                _
              $region166: #{my_mse_mae_ssim_diff.1} parent=141 // pred_check_branch
                %526 = sbr.rel target = $region168
              $region167: #{my_mse_mae_ssim_diff.1} parent=141 // pred_region
                _
              $region168: #{my_mse_mae_ssim_diff.1} parent=141 // pred_fallthru
                _
            $region142: #{my_mse_mae_ssim_diff.1} parent=137 // pred_fallthru
              _
            // Predicated region
            $region143: #{my_mse_mae_ssim_diff.1} parent=137 // pred_check
              _
            $region144: #{my_mse_mae_ssim_diff.1} parent=137 // pred_check_branch
              %472 = sbr.rel target = $region146
            $region145: #{my_mse_mae_ssim_diff.1} parent=137 // pred_region
              %s474 = ssub.s32 256, 1
              loop: start=0, step=1, limit=1
              $region147: #{my_mse_mae_ssim_diff.1} parent=145 // loop_pre_header
                _
              $region148: #{my_mse_mae_ssim_diff.1} parent=145 // loop_header
                %s476 = sphi 0, %s480
                %p477 = scmp.ge.s32.totalorder %s476, 1
                %s481 = sphi %s466, %s466
                %s482 = sphi %s461, %s461
              $region149: #{my_mse_mae_ssim_diff.1} parent=145 // loop_header_branch
                %479 = sbr.rel (%p477) target = $region153
              $region150: #{my_mse_mae_ssim_diff.1} parent=145 // loop_body
                %v483 = vld [vmem:[%s481] sm:%s474]
                %484 = vst [vmem:[%s482] sm:%s474] %v483
                %v485 = vld [vmem:[%s481 + $0x10] sm:%s474]
                %486 = vst [vmem:[%s482 + $0x8] sm:%s474] %v485
                %v487 = vld [vmem:[%s481 + $0x20] sm:%s474]
                %488 = vst [vmem:[%s482 + $0x10] sm:%s474] %v487
                %v489 = vld [vmem:[%s481 + $0x30] sm:%s474]
                %490 = vst [vmem:[%s482 + $0x18] sm:%s474] %v489
                %v491 = vld [vmem:[%s481 + $0x40] sm:%s474]
                %492 = vst [vmem:[%s482 + $0x20] sm:%s474] %v491
                %v493 = vld [vmem:[%s481 + $0x50] sm:%s474]
                %494 = vst [vmem:[%s482 + $0x28] sm:%s474] %v493
                %v495 = vld [vmem:[%s481 + $0x60] sm:%s474]
                %496 = vst [vmem:[%s482 + $0x30] sm:%s474] %v495
                %v497 = vld [vmem:[%s481 + $0x70] sm:%s474]
                %498 = vst [vmem:[%s482 + $0x38] sm:%s474] %v497
              $region151: #{my_mse_mae_ssim_diff.1} parent=145 // loop_footer
                %s480 = sadd.s32 1, %s476
              $region152: #{my_mse_mae_ssim_diff.1} parent=145 // loop_footer_branch
                %475 = sbr.rel target = $region148
              $region153: #{my_mse_mae_ssim_diff.1} parent=145 // loop_exit
                _
            $region146: #{my_mse_mae_ssim_diff.1} parent=137 // pred_fallthru
              _
          $region138: #{my_mse_mae_ssim_diff.1} parent=133 // pred_fallthru
            _
          %527 = vnop
        $region134: #{my_mse_mae_ssim_diff.1} parent=15 // pred_fallthru
          _
      $region16: #{my_mse_mae_ssim_diff.1} parent=5 // pred_fallthru
        _
      %p528 = scmp.le.s32.totalorder 1, %s13
      %p529 = scmp.lt.s32.totalorder %s13, 3
      %p530 = pnand %p528, %p529
      %p531 = pneg %p530
      // Predicated region
      $region169: #{my_mse_mae_ssim_diff.1} parent=5 // pred_check
        _
      $region170: #{my_mse_mae_ssim_diff.1} parent=5 // pred_check_branch
        %533 = sbr.rel (%p530) target = $region172
      $region171: #{my_mse_mae_ssim_diff.1} parent=5 // pred_region
        %s534 = ssub.s32 %s13, 1
        %s535 = sand.u32 %s40, 1
        %s536 = sand.u32 %s40, 1
        %s537 = smul.addr %s536, 64
        %s538 = scalar_lea.vmem [#allocation3], %s537
        // Predicated region
        $region173: #{my_mse_mae_ssim_diff.1} parent=171 // pred_check
          %p539 = pneg %p53
        $region174: #{my_mse_mae_ssim_diff.1} parent=171 // pred_check_branch
          %541 = sbr.rel (%p539) target = $region176
        $region175: #{my_mse_mae_ssim_diff.1} parent=171 // pred_region
          _
        $region176: #{my_mse_mae_ssim_diff.1} parent=171 // pred_fallthru
          _
        %s542 = sand.u32 %s68, 1
        %s543 = sand.u32 %s68, 1
        %s544 = smul.addr %s543, 64
        %s545 = scalar_lea.vmem [#allocation4], %s544
        // Predicated region
        $region177: #{my_mse_mae_ssim_diff.1} parent=171 // pred_check
          %p546 = pneg %p81
        $region178: #{my_mse_mae_ssim_diff.1} parent=171 // pred_check_branch
          %548 = sbr.rel (%p546) target = $region180
        $region179: #{my_mse_mae_ssim_diff.1} parent=171 // pred_region
          _
        $region180: #{my_mse_mae_ssim_diff.1} parent=171 // pred_fallthru
          _
        %s549 = sand.u32 %s100, 1
        %s550 = sand.u32 %s100, 1
        %s551 = smul.addr %s550, 56
        %s552 = scalar_lea.vmem [#allocation5], %s551
        // Predicated region
        $region181: #{my_mse_mae_ssim_diff.1} parent=171 // pred_check
          %p553 = pneg %p113
        $region182: #{my_mse_mae_ssim_diff.1} parent=171 // pred_check_branch
          %555 = sbr.rel (%p553) target = $region184
        $region183: #{my_mse_mae_ssim_diff.1} parent=171 // pred_region
          _
        $region184: #{my_mse_mae_ssim_diff.1} parent=171 // pred_fallthru
          _
        %s556 = sand.u32 %s128, 1
        %s557 = sand.u32 %s128, 1
        %s558 = smul.addr %s557, 64
        %s559 = scalar_lea.vmem [#allocation6], %s558
        // Predicated region
        $region185: #{my_mse_mae_ssim_diff.1} parent=171 // pred_check
          %p560 = pneg %p141
        $region186: #{my_mse_mae_ssim_diff.1} parent=171 // pred_check_branch
          %562 = sbr.rel (%p560) target = $region188
        $region187: #{my_mse_mae_ssim_diff.1} parent=171 // pred_region
          _
        $region188: #{my_mse_mae_ssim_diff.1} parent=171 // pred_fallthru
          _
        %s563 = sand.u32 %s40, 1
        %s564 = sand.u32 %s40, 1
        %s565 = smul.addr %s564, 64
        %s566 = scalar_lea.vmem [#allocation3], %s565
        %p567 = pneg %p53
        %p568 = pneg %p50
        %s569 = sand.u32 %s68, 1
        %s570 = sand.u32 %s68, 1
        %s571 = smul.addr %s570, 64
        %s572 = scalar_lea.vmem [#allocation4], %s571
        %p573 = pneg %p81
        %p574 = pneg %p78
        %s575 = sand.u32 %s100, 1
        %s576 = sand.u32 %s100, 1
        %s577 = smul.addr %s576, 56
        %s578 = scalar_lea.vmem [#allocation5], %s577
        %p579 = pneg %p113
        %p580 = pneg %p110
        %s581 = sand.u32 %s128, 1
        %s582 = sand.u32 %s128, 1
        %s583 = smul.addr %s582, 64
        %s584 = scalar_lea.vmem [#allocation6], %s583
        %p585 = pneg %p141
        %p586 = pneg %p138
        %p587 = pneg %p167
        %p588 = pneg %p164
        %p589 = scmp.lt.s32.totalorder %s22, 1
        %s590 = scalar_select %p589, %s22, 1
        %s591 = smul.addr %s590, 8
        %s592 = scalar_lea.vmem %s4, %s591
        %p593 = pneg %p193
        %p594 = pneg %p190
        %p595 = scmp.lt.s32.totalorder %s22, 1
        %s596 = scalar_select %p595, %s22, 1
        %s597 = smul.addr %s596, 8
        %s598 = scalar_lea.vmem %s5, %s597
        %p599 = pneg %p219
        %p600 = pneg %p216
        %p601 = scmp.lt.s32.totalorder %s22, 1
        %s602 = scalar_select %p601, %s22, 1
        %s603 = smul.addr %s602, 8
        %s604 = scalar_lea.vmem %s6, %s603
        %s605 = smul.u32 8, %s23
        %s606 = smul.u32 8, %s23
        %p607 = scmp.lt.s32.totalorder %s23, 0
        %s608 = scalar_select %p607, %s23, 0
        %s609 = smul.u32 7, %s608
        %s610 = smul.u32 8, %s23
        %p611 = scmp.lt.s32.totalorder %s22, 1
        %s612 = scalar_select %p611, %s22, 1
        %s613 = smul.addr %s612, 8
        %s614 = scalar_lea.vmem %s4, %s613
        %p615 = scmp.lt.s32.totalorder %s22, 1
        %s616 = scalar_select %p615, %s22, 1
        %s617 = smul.addr %s616, 8
        %s618 = scalar_lea.vmem %s5, %s617
        %p619 = scmp.lt.s32.totalorder %s22, 1
        %s620 = scalar_select %p619, %s22, 1
        %s621 = smul.addr %s620, 8
        %s622 = scalar_lea.vmem %s6, %s621
        %p623 = scmp.eq.s32.totalorder %s23, 0
        // Predicated region
        $region189: #{my_mse_mae_ssim_diff.1} parent=171 // pred_check
          %p624 = pneg %p623
        $region190: #{my_mse_mae_ssim_diff.1} parent=171 // pred_check_branch
          %626 = sbr.rel (%p624) target = $region192
        $region191: #{my_mse_mae_ssim_diff.1} parent=171 // pred_region
          %627 = vst [vmem:[%s614] sm:$0xff] 0.0
          %628 = vst [vmem:[%s618] sm:$0xff] 0.0
          %629 = vst [vmem:[%s622] sm:$0xff] 0.0
          %v630 = vld [vmem:[%s559] sm:$0xff]
          %631 = vst [vmem:[#allocation2] sm:$0xff] %v630
        $region192: #{my_mse_mae_ssim_diff.1} parent=171 // pred_fallthru
          _
        %v632 = vld [vmem:[%s538] sm:$0xff]
        %v633 = vld [vmem:[%s545] sm:$0xff]
        %v634 = vld [vmem:[%s559] sm:$0xff]
        %v635 = vsub.f32 %v632, %v633
        %v636 = vmul.f32 %v635, %v635
        %v637 = vadd.f32 %v636, 0.0
        %v638 = vadd.f32 %v637, 0.0
        %v639 = vand.u32 2147483647, %v635
        %v640 = vadd.f32 %v639, 0.0
        %v641 = vadd.f32 %v640, 0.0
        %v642 = vld [vmem:[#allocation2] sm:$0xff]
        %v643 = vsub.f32 %v642, %v634
        %v644 = vmul.f32 %v643, %v643
        %v645 = vadd.f32 %v644, 0.0
        %v646 = vadd.f32 %v645, 0.0
        %v647 = vld [vmem:[%s614] sm:$0xff]
        %v648 = vadd.f32 %v647, %v638
        %649 = vst [vmem:[%s614] sm:$0xff] %v648
        %v650 = vld [vmem:[%s618] sm:$0xff]
        %v651 = vadd.f32 %v650, %v641
        %652 = vst [vmem:[%s618] sm:$0xff] %v651
        %v653 = vld [vmem:[%s622] sm:$0xff]
        %v654 = vadd.f32 %v653, %v646
        %655 = vst [vmem:[%s622] sm:$0xff] %v654
        loop: start=0, step=1, limit=7
        $region193: #{my_mse_mae_ssim_diff.1} parent=171 // loop_pre_header
          _
        $region194: #{my_mse_mae_ssim_diff.1} parent=171 // loop_header
          %s657 = sphi 0, %s661
          %p658 = scmp.ge.s32.totalorder %s657, 7
        $region195: #{my_mse_mae_ssim_diff.1} parent=171 // loop_header_branch
          %660 = sbr.rel (%p658) target = $region199
        $region196: #{my_mse_mae_ssim_diff.1} parent=171 // loop_body
          %s662 = sadd.s32 %s657, 1
          %s663 = smul.u32 %s662, 8
          %s664 = scalar_lea.vmem %s538, %s663 [#allocation3]
          %v665 = vld [vmem:[%s664] sm:$0xff]
          %s666 = scalar_lea.vmem %s545, %s663 [#allocation4]
          %v667 = vld [vmem:[%s666] sm:$0xff]
          %s668 = scalar_lea.vmem %s559, %s663 [#allocation6]
          %v669 = vld [vmem:[%s668] sm:$0xff]
          %s670 = smul.u32 %s657, 8
          %s671 = scalar_lea.vmem %s559, %s670 [#allocation6]
          %v672 = vld [vmem:[%s671] sm:$0xff]
          %s673 = scalar_lea.vmem %s552, %s670 [#allocation5]
          %v674 = vld [vmem:[%s673] sm:$0xff]
          %v675 = vsub.f32 %v665, %v667
          %v676 = vmul.f32 %v675, %v675
          %v677 = vadd.f32 %v676, 0.0
          %v678 = vadd.f32 %v677, 0.0
          %v679 = vand.u32 2147483647, %v675
          %v680 = vadd.f32 %v679, 0.0
          %v681 = vadd.f32 %v680, 0.0
          %v682 = vadd.f32 %v674, %v672
          %v683 = vsub.f32 %v682, %v669
          %v684 = vmul.f32 %v683, %v683
          %v685 = vadd.f32 %v684, 0.0
          %v686 = vadd.f32 %v685, 0.0
          %v687 = vld [vmem:[%s614] sm:$0xff]
          %v688 = vadd.f32 %v687, %v678
          %689 = vst [vmem:[%s614] sm:$0xff] %v688
          %v690 = vld [vmem:[%s618] sm:$0xff]
          %v691 = vadd.f32 %v690, %v681
          %692 = vst [vmem:[%s618] sm:$0xff] %v691
          %v693 = vld [vmem:[%s622] sm:$0xff]
          %v694 = vadd.f32 %v693, %v686
          %695 = vst [vmem:[%s622] sm:$0xff] %v694
        $region197: #{my_mse_mae_ssim_diff.1} parent=171 // loop_footer
          %s661 = sadd.s32 1, %s657
        $region198: #{my_mse_mae_ssim_diff.1} parent=171 // loop_footer_branch
          %656 = sbr.rel target = $region194
        $region199: #{my_mse_mae_ssim_diff.1} parent=171 // loop_exit
          _
        %p696 = scmp.lt.s32.totalorder %s22, 1
        %s697 = scalar_select %p696, %s22, 1
        %s698 = smul.addr %s697, 8
        %s699 = scalar_lea.vmem %s4, %s698
        %p700 = scmp.lt.s32.totalorder %s22, 1
        %s701 = scalar_select %p700, %s22, 1
        %s702 = smul.addr %s701, 8
        %s703 = scalar_lea.vmem %s5, %s702
        %p704 = scmp.lt.s32.totalorder %s22, 1
        %s705 = scalar_select %p704, %s22, 1
        %s706 = smul.addr %s705, 8
        %s707 = scalar_lea.vmem %s6, %s706
        // Predicated region
        $region200: #{my_mse_mae_ssim_diff.1} parent=171 // pred_check
          %p708 = pneg %p164
        $region201: #{my_mse_mae_ssim_diff.1} parent=171 // pred_check_branch
          %710 = sbr.rel (%p708) target = $region203
        $region202: #{my_mse_mae_ssim_diff.1} parent=171 // pred_region
          _
        $region203: #{my_mse_mae_ssim_diff.1} parent=171 // pred_fallthru
          _
        // Predicated region
        $region204: #{my_mse_mae_ssim_diff.1} parent=171 // pred_check
          %p711 = pneg %p190
        $region205: #{my_mse_mae_ssim_diff.1} parent=171 // pred_check_branch
          %713 = sbr.rel (%p711) target = $region207
        $region206: #{my_mse_mae_ssim_diff.1} parent=171 // pred_region
          _
        $region207: #{my_mse_mae_ssim_diff.1} parent=171 // pred_fallthru
          _
        // Predicated region
        $region208: #{my_mse_mae_ssim_diff.1} parent=171 // pred_check
          %p714 = pneg %p216
        $region209: #{my_mse_mae_ssim_diff.1} parent=171 // pred_check_branch
          %716 = sbr.rel (%p714) target = $region211
        $region210: #{my_mse_mae_ssim_diff.1} parent=171 // pred_region
          _
        $region211: #{my_mse_mae_ssim_diff.1} parent=171 // pred_fallthru
          _
      $region172: #{my_mse_mae_ssim_diff.1} parent=5 // pred_fallthru
        _
      %p717 = scmp.le.s32.totalorder 2, %s13
      // Predicated region
      $region212: #{my_mse_mae_ssim_diff.1} parent=5 // pred_check
        %p718 = pneg %p717
      $region213: #{my_mse_mae_ssim_diff.1} parent=5 // pred_check_branch
        %720 = sbr.rel (%p718) target = $region215
      $region214: #{my_mse_mae_ssim_diff.1} parent=5 // pred_region
        %s721 = ssub.s32 %s13, 2
        // Predicated region
        $region216: #{my_mse_mae_ssim_diff.1} parent=214 // pred_check
          %p722 = pneg %p170
        $region217: #{my_mse_mae_ssim_diff.1} parent=214 // pred_check_branch
          %724 = sbr.rel (%p722) target = $region219
        $region218: #{my_mse_mae_ssim_diff.1} parent=214 // pred_region
          %p725 = scmp.lt.s32.totalorder %s24, 1
          %s726 = scalar_select %p725, %s24, 1
          %s727 = smul.addr %s726, 8
          %s728 = scalar_lea.vmem %s4, %s727
        $region219: #{my_mse_mae_ssim_diff.1} parent=214 // pred_fallthru
          _
        // Predicated region
        $region220: #{my_mse_mae_ssim_diff.1} parent=214 // pred_check
          %p729 = pneg %p196
        $region221: #{my_mse_mae_ssim_diff.1} parent=214 // pred_check_branch
          %731 = sbr.rel (%p729) target = $region223
        $region222: #{my_mse_mae_ssim_diff.1} parent=214 // pred_region
          %p732 = scmp.lt.s32.totalorder %s24, 1
          %s733 = scalar_select %p732, %s24, 1
          %s734 = smul.addr %s733, 8
          %s735 = scalar_lea.vmem %s5, %s734
        $region223: #{my_mse_mae_ssim_diff.1} parent=214 // pred_fallthru
          _
        // Predicated region
        $region224: #{my_mse_mae_ssim_diff.1} parent=214 // pred_check
          %p736 = pneg %p222
        $region225: #{my_mse_mae_ssim_diff.1} parent=214 // pred_check_branch
          %738 = sbr.rel (%p736) target = $region227
        $region226: #{my_mse_mae_ssim_diff.1} parent=214 // pred_region
          %p739 = scmp.lt.s32.totalorder %s24, 1
          %s740 = scalar_select %p739, %s24, 1
          %s741 = smul.addr %s740, 8
          %s742 = scalar_lea.vmem %s6, %s741
        $region227: #{my_mse_mae_ssim_diff.1} parent=214 // pred_fallthru
          _
      $region215: #{my_mse_mae_ssim_diff.1} parent=5 // pred_fallthru
        _
    $region6: #{my_mse_mae_ssim_diff.1} parent=1 // loop_footer
      %s17 = sadd.s32 1, %s13
    $region7: #{my_mse_mae_ssim_diff.1} parent=1 // loop_footer_branch
      %12 = sbr.rel target = $region3
    $region8: #{my_mse_mae_ssim_diff.1} parent=1 // loop_exit
      _

</llo_original>
